<compile_context>
chip_gen: v6e
topology: v6e:2x2x1
jax: 0.10.0
libtpu: 0.0.40
codegen_flags: <defaults>
</compile_context>

<pallas_src>
import functools

import jax
import jax.numpy as jnp
from jax import lax
from jax.experimental import pallas as pl
from jax.experimental.pallas import tpu as pltpu

EPS = 1e-5  # PyTorch GroupNorm default


def _default_sigmoid_dtype():
    """bf16 sigmoid on v6e/v7x (bf16 EUP), f32 everywhere else (v5e has no bf16 EUP)."""
    try:
        kind = jax.devices()[0].device_kind.lower()
    except Exception:  # pragma: no cover
        return jnp.float32
    if "v6" in kind or "v7" in kind:
        return jnp.bfloat16
    return jnp.float32


def _pick_block_b(batch, block_b):
    """Adaptive batch tile: big tiles for big batches, >=2 grid steps when possible."""
    if batch <= 8:
        return batch
    tb = min(block_b, batch)
    # Force at least 2 grid steps so the "parallel" batch axis can shard across
    # v7x's two TensorCores (harmless elsewhere).
    if pl.cdiv(batch, tb) < 2 and batch >= 16:
        tb = -(-batch // 2)
    tb = ((tb + 7) // 8) * 8  # keep the sublane (8) divisibility rule
    return tb


def fused_kernel(x_ref, w_ref, p_ref, seg_ref, segt_ref, o_ref, *, num_groups, sig_dtype):
    # x_ref:    (TB, IN)    f32   (cast to bf16 on-chip)
    # w_ref:    (IN, OUT)   bf16  (pre-transposed Linear weight, VMEM-resident)
    # p_ref:    (4, OUT)    f32   rows: [bias, gamma, beta, multiply_weight]
    # seg_ref:  (OUT, G)    f32   0/1 group-membership matrix
    # segt_ref: (G, OUT)    f32   its transpose
    # o_ref:    (TB, OUT)
    # ---- GEMM (MXU, bf16 inputs, f32 accumulation) ----
    x_bf = x_ref[...].astype(jnp.bfloat16)
    y = jnp.dot(x_bf, w_ref[...], preferred_element_type=jnp.float32)
    y = y + p_ref[0:1, :]                                    # + Linear bias, (TB, OUT) f32

    tb, out_f = y.shape
    inv_gs = 1.0 / (out_f // num_groups)

    seg = seg_ref[...]
    segt = segt_ref[...]

    # ---- GroupNorm stats via segment matmuls (MXU); elementwise stays on 2-D ----
    mean_g = jnp.dot(y, seg, preferred_element_type=jnp.float32) * inv_gs       # (TB, G)
    mean_b = jnp.dot(mean_g, segt, preferred_element_type=jnp.float32)          # (TB, OUT)
    c = y - mean_b
    var_g = jnp.dot(c * c, seg, preferred_element_type=jnp.float32) * inv_gs    # (TB, G)
    inv_g = lax.rsqrt(var_g + EPS)                                               # tiny EUP
    inv_b = jnp.dot(inv_g, segt, preferred_element_type=jnp.float32)             # (TB, OUT)
    yn = c * inv_b * p_ref[1:2, :] + p_ref[2:3, :]            # GroupNorm affine

    # ---- Swish -> *multiply_weight -> Swish ----
    s1 = jax.nn.sigmoid(yn.astype(sig_dtype)).astype(jnp.float32)
    v = yn * s1
    v = v * p_ref[3:4, :]
    s2 = jax.nn.sigmoid(v.astype(sig_dtype)).astype(jnp.float32)
    v = v * s2
    o_ref[...] = v.astype(o_ref.dtype)


def prepare_params(w, b, gamma, beta, mw, num_groups):
    """One-time parameter preprocessing (hoisted out of the per-call forward)."""
    out_features, _ = w.shape
    gs = out_features // num_groups
    wt_bf = jnp.asarray(w, jnp.bfloat16).T                     # (IN, OUT): MXU-native
    params = jnp.stack([b, gamma, beta, mw]).astype(jnp.float32)  # (4, OUT)
    gids = jnp.arange(out_features) // gs
    seg = (gids[:, None] == jnp.arange(num_groups)[None, :]).astype(jnp.float32)  # (OUT, G)
    return wt_bf, params, seg, jnp.asarray(seg.T)               # (G, OUT)


def fused_model_forward(x, wt_bf, params, seg, seg_t, num_groups, *,
                        block_b=512, sigmoid_dtype=None, out_dtype=jnp.float32):
    batch, in_features = x.shape
    out_features = wt_bf.shape[1]
    if sigmoid_dtype is None:
        sigmoid_dtype = _default_sigmoid_dtype()

    tb = _pick_block_b(batch, block_b)
    grid = (pl.cdiv(batch, tb),)

    kernel = functools.partial(fused_kernel, num_groups=int(num_groups),
                               sig_dtype=sigmoid_dtype)
    return pl.pallas_call(
        kernel,
        out_shape=jax.ShapeDtypeStruct((batch, out_features), out_dtype),
        grid=grid,
        in_specs=[
            pl.BlockSpec((tb, in_features), lambda i: (i, 0)),             # x: tiled on batch
            pl.BlockSpec((in_features, out_features), lambda i: (0, 0)),   # W: resident
            pl.BlockSpec((4, out_features), lambda i: (0, 0)),             # packed params
            pl.BlockSpec((out_features, num_groups), lambda i: (0, 0)),    # segment matrix
            pl.BlockSpec((num_groups, out_features), lambda i: (0, 0)),    # its transpose
        ],
        out_specs=pl.BlockSpec((tb, out_features), lambda i: (i, 0)),
        compiler_params=pltpu.CompilerParams(
            dimension_semantics=("parallel",)),   # shard batch tiles across v7x's 2 TCs
    )(x, wt_bf, params, seg, seg_t)


def reference_forward(x, w, b, gamma, beta, mw, num_groups, *,
                      gemm_dtype=jnp.float32, sigmoid_dtype=jnp.float32):
    """Pure-JAX reference matching the PyTorch module (precision knobs mimic the kernel)."""
    y = jnp.dot(x.astype(gemm_dtype), w.astype(gemm_dtype).T,
                preferred_element_type=jnp.float32) + b
    B, OUT = y.shape
    gs = OUT // num_groups
    yg = y.reshape(B, num_groups, gs)
    mean = yg.mean(-1, keepdims=True)
    var = ((yg - mean) ** 2).mean(-1, keepdims=True)
    yn = ((yg - mean) / jnp.sqrt(var + EPS)).reshape(B, OUT)
    yn = yn * gamma + beta
    v = yn * jax.nn.sigmoid(yn.astype(sigmoid_dtype)).astype(jnp.float32)
    v = v * mw
    v = v * jax.nn.sigmoid(v.astype(sigmoid_dtype)).astype(jnp.float32)
    return v


if __name__ == "__main__":
    # Small shapes consistent with the module (scaled down from in=512 / out=1024 / 16 groups).
    batch = 8
    in_features = 64
    out_features = 128
    num_groups = 16

    key = jax.random.PRNGKey(0)
    kx, kw, kb, kmw = jax.random.split(key, 4)

    x = jax.random.normal(kx, (batch, in_features), dtype=jnp.float32)
    bound = 1.0 / (in_features ** 0.5)
    w = jax.random.uniform(kw, (out_features, in_features), minval=-bound, maxval=bound,
                           dtype=jnp.float32)
    b = jax.random.uniform(kb, (out_features,), minval=-bound, maxval=bound, dtype=jnp.float32)
    gamma = jnp.ones((out_features,), dtype=jnp.float32)   # GroupNorm default weight
    beta = jnp.zeros((out_features,), dtype=jnp.float32)   # GroupNorm default bias
    mw = jax.random.normal(kmw, (out_features,), dtype=jnp.float32)

    # One-time parameter prep (hoisted weight transpose/cast, packed per-channel params).
    wt_bf, params, seg, seg_t = prepare_params(w, b, gamma, beta, mw, num_groups)

    # --- Correctness run: f32 sigmoids everywhere so the only intentional precision gap
    #     is the bf16 GEMM inputs (mimicked by the reference). Tolerance leaves headroom
    #     for reduced-precision MXU accumulation in the small group-stat matmuls.
    out = fused_model_forward(x, wt_bf, params, seg, seg_t, num_groups,
                              sigmoid_dtype=jnp.float32)
    out = jax.block_until_ready(out)
    assert out.shape == (batch, out_features)
    ref = reference_forward(x, w, b, gamma, beta, mw, num_groups,
                            gemm_dtype=jnp.bfloat16, sigmoid_dtype=jnp.float32)
    err = float(jnp.max(jnp.abs(out - ref)))
    assert jnp.allclose(out, ref, atol=2e-2, rtol=2e-2), err

    # --- Fast-path run with the device-default sigmoid dtype (bf16 on v6e/v7x, f32 on v5e).
    out_fast = fused_model_forward(x, wt_bf, params, seg, seg_t, num_groups)
    out_fast = jax.block_until_ready(out_fast)
    assert bool(jnp.all(jnp.isfinite(out_fast)))
    assert float(jnp.max(jnp.abs(out_fast - ref))) < 1e-1  # loose sanity vs f32 reference

    print("KERNEL_OK")
</pallas_src>

<mosaic_0001>
module attributes {stable_mosaic.version = 11 : i64} {
  func.func @fused_kernel(%arg0: i32, %arg1: memref<8x64xf32, #tpu.memory_space<vmem>>, %arg2: memref<64x128xbf16, #tpu.memory_space<vmem>>, %arg3: memref<4x128xf32, #tpu.memory_space<vmem>>, %arg4: memref<128x16xf32, #tpu.memory_space<vmem>>, %arg5: memref<16x128xf32, #tpu.memory_space<vmem>>, %arg6: memref<8x128xf32, #tpu.memory_space<vmem>>) attributes {dimension_semantics = [#tpu.dimension_semantics<parallel>], iteration_bounds = array<i64: 1>, scalar_prefetch = 0 : i64, scratch_operands = 0 : i64, tpu.core_type = #tpu.core_type<tc>, window_params = [{transform_indices = @transform_0, window_bounds = array<i64: 8, 64>}, {pipeline_mode = #tpu.pipeline_mode<synchronous>, transform_indices = @transform_1, window_bounds = array<i64: 64, 128>}, {pipeline_mode = #tpu.pipeline_mode<synchronous>, transform_indices = @transform_2, window_bounds = array<i64: 4, 128>}, {pipeline_mode = #tpu.pipeline_mode<synchronous>, transform_indices = @transform_3, window_bounds = array<i64: 128, 16>}, {pipeline_mode = #tpu.pipeline_mode<synchronous>, transform_indices = @transform_4, window_bounds = array<i64: 16, 128>}, {transform_indices = @transform_5, window_bounds = array<i64: 8, 128>}]} {
    %c0 = arith.constant 0 : index
    %c0_0 = arith.constant 0 : index
    %0 = vector.load %arg1[%c0, %c0_0] : memref<8x64xf32, #tpu.memory_space<vmem>>, vector<8x64xf32>
    %1 = arith.truncf %0 : vector<8x64xf32> to vector<8x64xbf16>
    %c0_1 = arith.constant 0 : index
    %c0_2 = arith.constant 0 : index
    %2 = vector.load %arg2[%c0_1, %c0_2] : memref<64x128xbf16, #tpu.memory_space<vmem>>, vector<64x128xbf16>
    %cst = arith.constant dense<0.000000e+00> : vector<8x128xf32>
    %3 = tpu.matmul %1, %2, %cst {dimension_numbers = #tpu.dot_dimension_numbers<[1], [0], [0], [1], [0, 0, 1, 1], [], []>} : vector<8x64xbf16>, vector<64x128xbf16>, vector<8x128xf32> -> vector<8x128xf32>
    %c0_3 = arith.constant 0 : index
    %c0_4 = arith.constant 0 : index
    %4 = vector.load %arg3[%c0_3, %c0_4] : memref<4x128xf32, #tpu.memory_space<vmem>>, vector<1x128xf32>
    %5 = vector.broadcast %4 : vector<1x128xf32> to vector<8x128xf32>
    %6 = arith.addf %3, %5 : vector<8x128xf32>
    %c0_5 = arith.constant 0 : index
    %c0_6 = arith.constant 0 : index
    %7 = vector.load %arg4[%c0_5, %c0_6] : memref<128x16xf32, #tpu.memory_space<vmem>>, vector<128x16xf32>
    %c0_7 = arith.constant 0 : index
    %c0_8 = arith.constant 0 : index
    %8 = vector.load %arg5[%c0_7, %c0_8] : memref<16x128xf32, #tpu.memory_space<vmem>>, vector<16x128xf32>
    %cst_9 = arith.constant dense<0.000000e+00> : vector<8x16xf32>
    %9 = tpu.matmul %6, %7, %cst_9 {dimension_numbers = #tpu.dot_dimension_numbers<[1], [0], [0], [1], [0, 0, 1, 1], [], []>} : vector<8x128xf32>, vector<128x16xf32>, vector<8x16xf32> -> vector<8x16xf32>
    %cst_10 = arith.constant 1.250000e-01 : f32
    %10 = vector.broadcast %cst_10 : f32 to vector<8x16xf32>
    %11 = arith.mulf %9, %10 : vector<8x16xf32>
    %cst_11 = arith.constant dense<0.000000e+00> : vector<8x128xf32>
    %12 = tpu.matmul %11, %8, %cst_11 {dimension_numbers = #tpu.dot_dimension_numbers<[1], [0], [0], [1], [0, 0, 1, 1], [], []>} : vector<8x16xf32>, vector<16x128xf32>, vector<8x128xf32> -> vector<8x128xf32>
    %13 = arith.subf %6, %12 : vector<8x128xf32>
    %14 = arith.mulf %13, %13 : vector<8x128xf32>
    %cst_12 = arith.constant dense<0.000000e+00> : vector<8x16xf32>
    %15 = tpu.matmul %14, %7, %cst_12 {dimension_numbers = #tpu.dot_dimension_numbers<[1], [0], [0], [1], [0, 0, 1, 1], [], []>} : vector<8x128xf32>, vector<128x16xf32>, vector<8x16xf32> -> vector<8x16xf32>
    %cst_13 = arith.constant 1.250000e-01 : f32
    %16 = vector.broadcast %cst_13 : f32 to vector<8x16xf32>
    %17 = arith.mulf %15, %16 : vector<8x16xf32>
    %cst_14 = arith.constant 9.99999974E-6 : f32
    %18 = vector.broadcast %cst_14 : f32 to vector<8x16xf32>
    %19 = arith.addf %17, %18 : vector<8x16xf32>
    %20 = math.rsqrt %19 : vector<8x16xf32>
    %cst_15 = arith.constant dense<0.000000e+00> : vector<8x128xf32>
    %21 = tpu.matmul %20, %8, %cst_15 {dimension_numbers = #tpu.dot_dimension_numbers<[1], [0], [0], [1], [0, 0, 1, 1], [], []>} : vector<8x16xf32>, vector<16x128xf32>, vector<8x128xf32> -> vector<8x128xf32>
    %22 = arith.mulf %13, %21 : vector<8x128xf32>
    %c1 = arith.constant 1 : index
    %c0_16 = arith.constant 0 : index
    %23 = vector.load %arg3[%c1, %c0_16] : memref<4x128xf32, #tpu.memory_space<vmem>>, vector<1x128xf32>
    %24 = vector.broadcast %23 : vector<1x128xf32> to vector<8x128xf32>
    %25 = arith.mulf %22, %24 : vector<8x128xf32>
    %c2 = arith.constant 2 : index
    %c0_17 = arith.constant 0 : index
    %26 = vector.load %arg3[%c2, %c0_17] : memref<4x128xf32, #tpu.memory_space<vmem>>, vector<1x128xf32>
    %27 = vector.broadcast %26 : vector<1x128xf32> to vector<8x128xf32>
    %28 = arith.addf %25, %27 : vector<8x128xf32>
    %29 = arith.negf %28 : vector<8x128xf32>
    %30 = math.exp %29 : vector<8x128xf32>
    %cst_18 = arith.constant 1.000000e+00 : f32
    %31 = vector.broadcast %cst_18 : f32 to vector<8x128xf32>
    %32 = arith.addf %31, %30 : vector<8x128xf32>
    %33 = arith.divf %31, %32 : vector<8x128xf32>
    %34 = arith.mulf %28, %33 : vector<8x128xf32>
    %c3 = arith.constant 3 : index
    %c0_19 = arith.constant 0 : index
    %35 = vector.load %arg3[%c3, %c0_19] : memref<4x128xf32, #tpu.memory_space<vmem>>, vector<1x128xf32>
    %36 = vector.broadcast %35 : vector<1x128xf32> to vector<8x128xf32>
    %37 = arith.mulf %34, %36 : vector<8x128xf32>
    %38 = arith.negf %37 : vector<8x128xf32>
    %39 = math.exp %38 : vector<8x128xf32>
    %cst_20 = arith.constant 1.000000e+00 : f32
    %40 = vector.broadcast %cst_20 : f32 to vector<8x128xf32>
    %41 = arith.addf %40, %39 : vector<8x128xf32>
    %42 = arith.divf %40, %41 : vector<8x128xf32>
    %43 = arith.mulf %37, %42 : vector<8x128xf32>
    %c0_21 = arith.constant 0 : index
    %c0_22 = arith.constant 0 : index
    %44 = vector.load %arg6[%c0_21, %c0_22] : memref<8x128xf32, #tpu.memory_space<vmem>>, vector<8x128xf32>
    tpu.vector_store %arg6[%c0_21, %c0_22], %43 {strides = array<i32>} : memref<8x128xf32, #tpu.memory_space<vmem>>, vector<8x128xf32>,
    return
  }
  func.func @transform_0(%arg0: i32) -> (i32, i32) {
    %c0_i32 = arith.constant 0 : i32
    %c0_i32_0 = arith.constant 0 : i32
    return %arg0, %c0_i32 : i32, i32
  }
  func.func @transform_1(%arg0: i32) -> (i32, i32) {
    %c0_i32 = arith.constant 0 : i32
    %c0_i32_0 = arith.constant 0 : i32
    %c0_i32_1 = arith.constant 0 : i32
    return %c0_i32, %c0_i32_0 : i32, i32
  }
  func.func @transform_2(%arg0: i32) -> (i32, i32) {
    %c0_i32 = arith.constant 0 : i32
    %c0_i32_0 = arith.constant 0 : i32
    %c0_i32_1 = arith.constant 0 : i32
    return %c0_i32, %c0_i32_0 : i32, i32
  }
  func.func @transform_3(%arg0: i32) -> (i32, i32) {
    %c0_i32 = arith.constant 0 : i32
    %c0_i32_0 = arith.constant 0 : i32
    %c0_i32_1 = arith.constant 0 : i32
    return %c0_i32, %c0_i32_0 : i32, i32
  }
  func.func @transform_4(%arg0: i32) -> (i32, i32) {
    %c0_i32 = arith.constant 0 : i32
    %c0_i32_0 = arith.constant 0 : i32
    %c0_i32_1 = arith.constant 0 : i32
    return %c0_i32, %c0_i32_0 : i32, i32
  }
  func.func @transform_5(%arg0: i32) -> (i32, i32) {
    %c0_i32 = arith.constant 0 : i32
    %c0_i32_0 = arith.constant 0 : i32
    return %arg0, %c0_i32 : i32, i32
  }
}

</mosaic_0001>

<llo_original>
// kernel: tpu_custom_call.1
$region0: #{tpu_custom_call.1}
  #allocation0 [shape = 'u32[]', space=smem, size = 0x4, offset = 0x4, fixed_abs, tag = 'smem constant byte address 0x4 - core index']
  #allocation1 [shape = 'u32[144,128]{1,0:T(1,128)}', space=vmem, size = 0x12000, scoped, tag = 'internal scratch']
  %s0 = inlined_call_operand.vmem [shape: f32[8,64], index: 0, kind: input, shape index: {}]
  %s1 = inlined_call_operand.vmem [shape: bf16[64,128], index: 1, kind: input, shape index: {}]
  %s2 = inlined_call_operand.vmem [shape: f32[4,128], index: 2, kind: input, shape index: {}]
  %s3 = inlined_call_operand.vmem [shape: f32[128,16], index: 3, kind: input, shape index: {}]
  %s4 = inlined_call_operand.vmem [shape: f32[16,128], index: 4, kind: input, shape index: {}]
  %s5 = inlined_call_operand.hbm [shape: f32[8,128], index: 5, kind: output, shape index: {}]
  %s6 = sld [smem:[#allocation0]]
  $region30: #{tpu_custom_call.1} parent=0
    _
  %s8 = ssub.s32 1, %s6
  %s9 = scalar_select 0, %s8, %s6
  $region1: #{tpu_custom_call.1} parent=0
    #allocation2 [shape = 'u8[4096]{0}', space=vmem, size = 0x1000, scoped, tag = 'output window, operand 0, single buffered']
    #allocation3 [shape = 's32[1]{0}', space=sflag, size = 0x4, scoped, tag = 'scoped memory for tpu_custom_call.1']
    %10 = vsyncpa [#allocation3], 0
    // Predicated region
    $region2: #{tpu_custom_call.1} parent=1 // pred_check
      _
    $region3: #{tpu_custom_call.1} parent=1 // pred_check_branch
      %12 = sbr.rel (0) target = $region5
    $region4: #{tpu_custom_call.1} parent=1 // pred_region
      _
    $region5: #{tpu_custom_call.1} parent=1 // pred_fallthru
      _
    // Predicated region
    $region6: #{tpu_custom_call.1} parent=1 // pred_check
      _
    $region7: #{tpu_custom_call.1} parent=1 // pred_check_branch
      %14 = sbr.rel (0) target = $region9
    $region8: #{tpu_custom_call.1} parent=1 // pred_region
      _
    $region9: #{tpu_custom_call.1} parent=1 // pred_fallthru
      _
    // Predicated region
    $region10: #{tpu_custom_call.1} parent=1 // pred_check
      _
    $region11: #{tpu_custom_call.1} parent=1 // pred_check_branch
      %16 = sbr.rel (0) target = $region13
    $region12: #{tpu_custom_call.1} parent=1 // pred_region
      _
    $region13: #{tpu_custom_call.1} parent=1 // pred_fallthru
      _
    // Predicated region
    $region14: #{tpu_custom_call.1} parent=1 // pred_check
      _
    $region15: #{tpu_custom_call.1} parent=1 // pred_check_branch
      %18 = sbr.rel (0) target = $region17
    $region16: #{tpu_custom_call.1} parent=1 // pred_region
      _
    $region17: #{tpu_custom_call.1} parent=1 // pred_fallthru
      _
    // Predicated region
    $region18: #{tpu_custom_call.1} parent=1 // pred_check
      _
    $region19: #{tpu_custom_call.1} parent=1 // pred_check_branch
      %20 = sbr.rel (0) target = $region21
    $region20: #{tpu_custom_call.1} parent=1 // pred_region
      _
    $region21: #{tpu_custom_call.1} parent=1 // pred_fallthru
      _
    %v22 = vld [vmem:[%s0] sm:$0xff]
    %v23 = vpack.c.bf16 %v22, %v22
    %v24 = vld [vmem:[%s1] sm:$0xf]
    %v25 = vld [vmem:[%s1 + $0x4] sm:$0xf]
    %v26 = vld [vmem:[%s1 + $0x8] sm:$0xf]
    %v27 = vld [vmem:[%s1 + $0xc] sm:$0xf]
    %v28 = vld [vmem:[%s1 + $0x10] sm:$0xf]
    %v29 = vld [vmem:[%s1 + $0x14] sm:$0xf]
    %v30 = vld [vmem:[%s1 + $0x18] sm:$0xf]
    %v31 = vld [vmem:[%s1 + $0x1c] sm:$0xf]
    %v32 = vld [vmem:[%s2] sm:$0x1]
    %v33 = vlaneseq
    %v34 = vshrl.u32 %v33, 7
    %v35 = vsub.s32 0, %v34
    %v36 = vrot.slane %v32, %v35
    %v45 = vunpack.c.l.b16 %v24
    %v46 = vunpack.c.l.b16 %v25
    %v47 = vunpack.c.l.b16 %v26
    %v48 = vunpack.c.l.b16 %v27
    %v49 = vunpack.c.l.b16 %v28
    %v50 = vunpack.c.l.b16 %v29
    %v51 = vunpack.c.l.b16 %v30
    %v52 = vunpack.c.l.b16 %v31
    %v53 = vpack.c.b16 %v46, %v45
    %v54 = vpack.c.b16 %v48, %v47
    %v55 = vpack.c.b16 %v50, %v49
    %v56 = vpack.c.b16 %v52, %v51
    %vm61 = vcmask 523264
    %v63 = vsel %vm61, %v23, 0
    %65 = vmatprep.subr.bf16.mxu0 0
    %66 = vmatpush1.bf16.msra.mxu0 0
    %67 = vmatprep.subr.bf16.mxu0 0
    %68 = vmatpush1.bf16.msra.mxu0 0
    %69 = vmatprep.subr.bf16.mxu0 0
    %70 = vmatpush1.bf16.msra.mxu0 0
    %71 = vmatprep.subr.bf16.mxu0 0
    %72 = vmatpush1.bf16.msra.mxu0 0
    %73 = vmatprep.subr.bf16.mxu0 0
    %74 = vmatpush1.bf16.msra.mxu0 %v56
    %75 = vmatprep.subr.bf16.mxu0 0
    %76 = vmatpush1.bf16.msra.mxu0 %v55
    %77 = vmatprep.subr.bf16.mxu0 0
    %78 = vmatpush1.bf16.msra.mxu0 %v54
    %79 = vmatprep.subr.bf16.mxu0 0
    %80 = vmatpush1.bf16.msra.mxu0 %v53
    %81 = vmatprep.subr.bf16.mxu0 0
    %82 = vmatpush2.bf16.msra.mxu0 0
    %83 = vmatprep.subr.bf16.mxu0 0
    %84 = vmatpush2.bf16.msra.mxu0 0
    %85 = vmatprep.subr.bf16.mxu0 0
    %86 = vmatpush2.bf16.msra.mxu0 0
    %87 = vmatprep.subr.bf16.mxu0 0
    %88 = vmatpush2.bf16.msra.mxu0 0
    %89 = vmatprep.subr.bf16.mxu0 0
    %90 = vmatpush2.bf16.msra.mxu0 0
    %91 = vmatprep.subr.bf16.mxu0 0
    %92 = vmatpush2.bf16.msra.mxu0 0
    %93 = vmatprep.subr.bf16.mxu0 0
    %94 = vmatpush2.bf16.msra.mxu0 0
    %95 = vmatprep.subr.bf16.mxu0 0
    %96 = vmatpush2.bf16.msra.mxu0 0
    %97 = vmatprep.mubr.bf16.mxu0 0
    %98 = vmatmul.mubr.bf16.gmra.mxu0 %v63
    %v99 = vpop.f32.mrf.mxu0
    %v100 = vadd.f32 %v36, %v99
    %v101 = vpop.f32.mrf.mxu0
    %v102 = vpop.f32.mrf.mxu0
    %v103 = vpop.f32.mrf.mxu0
    %104 = vdwg.mxu0
    %v105 = vld [vmem:[%s3] sm:$0xff]
    %v106 = vld [vmem:[%s3 + $0x8] sm:$0xff]
    %v107 = vld [vmem:[%s3 + $0x10] sm:$0xff]
    %v108 = vld [vmem:[%s3 + $0x18] sm:$0xff]
    %v109 = vld [vmem:[%s3 + $0x20] sm:$0xff]
    %v110 = vld [vmem:[%s3 + $0x28] sm:$0xff]
    %v111 = vld [vmem:[%s3 + $0x30] sm:$0xff]
    %v112 = vld [vmem:[%s3 + $0x38] sm:$0xff]
    %v113 = vld [vmem:[%s3 + $0x40] sm:$0xff]
    %v114 = vld [vmem:[%s3 + $0x48] sm:$0xff]
    %v115 = vld [vmem:[%s3 + $0x50] sm:$0xff]
    %v116 = vld [vmem:[%s3 + $0x58] sm:$0xff]
    %v117 = vld [vmem:[%s3 + $0x60] sm:$0xff]
    %v118 = vld [vmem:[%s3 + $0x68] sm:$0xff]
    %v119 = vld [vmem:[%s3 + $0x70] sm:$0xff]
    %v120 = vld [vmem:[%s3 + $0x78] sm:$0xff]
    %v121 = vld [vmem:[%s4] sm:$0xff]
    %v122 = vld [vmem:[%s4 + $0x8] sm:$0xff]
    %123 = vmatprep.subr.mxu0 0.0
    %124 = vmatpush1.msra.mxu0 %v120
    %125 = vmatprep.subr.mxu0 0.0
    %126 = vmatpush1.msra.mxu0 %v119
    %127 = vmatprep.subr.mxu0 0.0
    %128 = vmatpush1.msra.mxu0 %v118
    %129 = vmatprep.subr.mxu0 0.0
    %130 = vmatpush1.msra.mxu0 %v117
    %131 = vmatprep.subr.mxu0 0.0
    %132 = vmatpush1.msra.mxu0 %v116
    %133 = vmatprep.subr.mxu0 0.0
    %134 = vmatpush1.msra.mxu0 %v115
    %135 = vmatprep.subr.mxu0 0.0
    %136 = vmatpush1.msra.mxu0 %v114
    %137 = vmatprep.subr.mxu0 0.0
    %138 = vmatpush1.msra.mxu0 %v113
    %139 = vmatprep.subr.mxu0 0.0
    %140 = vmatpush1.msra.mxu0 %v112
    %141 = vmatprep.subr.mxu0 0.0
    %142 = vmatpush1.msra.mxu0 %v111
    %143 = vmatprep.subr.mxu0 0.0
    %144 = vmatpush1.msra.mxu0 %v110
    %145 = vmatprep.subr.mxu0 0.0
    %146 = vmatpush1.msra.mxu0 %v109
    %147 = vmatprep.subr.mxu0 0.0
    %148 = vmatpush1.msra.mxu0 %v108
    %149 = vmatprep.subr.mxu0 0.0
    %150 = vmatpush1.msra.mxu0 %v107
    %151 = vmatprep.subr.mxu0 0.0
    %152 = vmatpush1.msra.mxu0 %v106
    %153 = vmatprep.subr.mxu0 0.0
    %154 = vmatpush1.msra.mxu0 %v105
    %155 = vmatprep.subr.mxu0 0.0
    %156 = vmatpush2.msra.mxu0 0.0
    %157 = vmatprep.subr.mxu0 0.0
    %158 = vmatpush2.msra.mxu0 0.0
    %159 = vmatprep.subr.mxu0 0.0
    %160 = vmatpush2.msra.mxu0 0.0
    %161 = vmatprep.subr.mxu0 0.0
    %162 = vmatpush2.msra.mxu0 0.0
    %163 = vmatprep.subr.mxu0 0.0
    %164 = vmatpush2.msra.mxu0 0.0
    %165 = vmatprep.subr.mxu0 0.0
    %166 = vmatpush2.msra.mxu0 0.0
    %167 = vmatprep.subr.mxu0 0.0
    %168 = vmatpush2.msra.mxu0 0.0
    %169 = vmatprep.subr.mxu0 0.0
    %170 = vmatpush2.msra.mxu0 0.0
    %171 = vmatprep.subr.mxu0 0.0
    %172 = vmatpush2.msra.mxu0 0.0
    %173 = vmatprep.subr.mxu0 0.0
    %174 = vmatpush2.msra.mxu0 0.0
    %175 = vmatprep.subr.mxu0 0.0
    %176 = vmatpush2.msra.mxu0 0.0
    %177 = vmatprep.subr.mxu0 0.0
    %178 = vmatpush2.msra.mxu0 0.0
    %179 = vmatprep.subr.mxu0 0.0
    %180 = vmatpush2.msra.mxu0 0.0
    %181 = vmatprep.subr.mxu0 0.0
    %182 = vmatpush2.msra.mxu0 0.0
    %183 = vmatprep.subr.mxu0 0.0
    %184 = vmatpush2.msra.mxu0 0.0
    %185 = vmatprep.subr.mxu0 0.0
    %186 = vmatpush2.msra.mxu0 0.0
    %187 = vmatprep.mubr.f32.mxu0 0.0
    %188 = vmatmul.mubr.f32.gmra.mxu0 %v100
    %v189 = vpop.f32.mrf.mxu0
    %v190 = vadd.f32 0.0, %v189
    %v191 = vpop.f32.mrf.mxu0
    %192 = vdwg.mxu0
    %v193 = vmul.f32 %v190, 0.125
    %vm194 = vcmask 130048
    %v196 = vsel %vm194, %v193, 0
    %198 = vmatprep.subr.mxu0 0.0
    %199 = vmatpush1.msra.mxu0 0.0
    %200 = vmatprep.subr.mxu0 0.0
    %201 = vmatpush1.msra.mxu0 0.0
    %202 = vmatprep.subr.mxu0 0.0
    %203 = vmatpush1.msra.mxu0 0.0
    %204 = vmatprep.subr.mxu0 0.0
    %205 = vmatpush1.msra.mxu0 0.0
    %206 = vmatprep.subr.mxu0 0.0
    %207 = vmatpush1.msra.mxu0 0.0
    %208 = vmatprep.subr.mxu0 0.0
    %209 = vmatpush1.msra.mxu0 0.0
    %210 = vmatprep.subr.mxu0 0.0
    %211 = vmatpush1.msra.mxu0 0.0
    %212 = vmatprep.subr.mxu0 0.0
    %213 = vmatpush1.msra.mxu0 0.0
    %214 = vmatprep.subr.mxu0 0.0
    %215 = vmatpush1.msra.mxu0 0.0
    %216 = vmatprep.subr.mxu0 0.0
    %217 = vmatpush1.msra.mxu0 0.0
    %218 = vmatprep.subr.mxu0 0.0
    %219 = vmatpush1.msra.mxu0 0.0
    %220 = vmatprep.subr.mxu0 0.0
    %221 = vmatpush1.msra.mxu0 0.0
    %222 = vmatprep.subr.mxu0 0.0
    %223 = vmatpush1.msra.mxu0 0.0
    %224 = vmatprep.subr.mxu0 0.0
    %225 = vmatpush1.msra.mxu0 0.0
    %226 = vmatprep.subr.mxu0 0.0
    %227 = vmatpush1.msra.mxu0 %v122
    %228 = vmatprep.subr.mxu0 0.0
    %229 = vmatpush1.msra.mxu0 %v121
    %230 = vmatprep.subr.mxu0 0.0
    %231 = vmatpush2.msra.mxu0 0.0
    %232 = vmatprep.subr.mxu0 0.0
    %233 = vmatpush2.msra.mxu0 0.0
    %234 = vmatprep.subr.mxu0 0.0
    %235 = vmatpush2.msra.mxu0 0.0
    %236 = vmatprep.subr.mxu0 0.0
    %237 = vmatpush2.msra.mxu0 0.0
    %238 = vmatprep.subr.mxu0 0.0
    %239 = vmatpush2.msra.mxu0 0.0
    %240 = vmatprep.subr.mxu0 0.0
    %241 = vmatpush2.msra.mxu0 0.0
    %242 = vmatprep.subr.mxu0 0.0
    %243 = vmatpush2.msra.mxu0 0.0
    %244 = vmatprep.subr.mxu0 0.0
    %245 = vmatpush2.msra.mxu0 0.0
    %246 = vmatprep.subr.mxu0 0.0
    %247 = vmatpush2.msra.mxu0 0.0
    %248 = vmatprep.subr.mxu0 0.0
    %249 = vmatpush2.msra.mxu0 0.0
    %250 = vmatprep.subr.mxu0 0.0
    %251 = vmatpush2.msra.mxu0 0.0
    %252 = vmatprep.subr.mxu0 0.0
    %253 = vmatpush2.msra.mxu0 0.0
    %254 = vmatprep.subr.mxu0 0.0
    %255 = vmatpush2.msra.mxu0 0.0
    %256 = vmatprep.subr.mxu0 0.0
    %257 = vmatpush2.msra.mxu0 0.0
    %258 = vmatprep.subr.mxu0 0.0
    %259 = vmatpush2.msra.mxu0 0.0
    %260 = vmatprep.subr.mxu0 0.0
    %261 = vmatpush2.msra.mxu0 0.0
    %262 = vmatprep.mubr.f32.mxu0 0.0
    %263 = vmatmul.mubr.f32.gmra.mxu0 %v196
    %v264 = vpop.f32.mrf.mxu0
    %v265 = vadd.f32 0.0, %v264
    %v266 = vpop.f32.mrf.mxu0
    %267 = vdwg.mxu0
    %v268 = vsub.f32 %v100, %v265
    %v269 = vmul.f32 %v268, %v268
    %270 = vmatprep.subr.mxu0 0.0
    %271 = vmatpush1.msra.mxu0 %v120
    %272 = vmatprep.subr.mxu0 0.0
    %273 = vmatpush1.msra.mxu0 %v119
    %274 = vmatprep.subr.mxu0 0.0
    %275 = vmatpush1.msra.mxu0 %v118
    %276 = vmatprep.subr.mxu0 0.0
    %277 = vmatpush1.msra.mxu0 %v117
    %278 = vmatprep.subr.mxu0 0.0
    %279 = vmatpush1.msra.mxu0 %v116
    %280 = vmatprep.subr.mxu0 0.0
    %281 = vmatpush1.msra.mxu0 %v115
    %282 = vmatprep.subr.mxu0 0.0
    %283 = vmatpush1.msra.mxu0 %v114
    %284 = vmatprep.subr.mxu0 0.0
    %285 = vmatpush1.msra.mxu0 %v113
    %286 = vmatprep.subr.mxu0 0.0
    %287 = vmatpush1.msra.mxu0 %v112
    %288 = vmatprep.subr.mxu0 0.0
    %289 = vmatpush1.msra.mxu0 %v111
    %290 = vmatprep.subr.mxu0 0.0
    %291 = vmatpush1.msra.mxu0 %v110
    %292 = vmatprep.subr.mxu0 0.0
    %293 = vmatpush1.msra.mxu0 %v109
    %294 = vmatprep.subr.mxu0 0.0
    %295 = vmatpush1.msra.mxu0 %v108
    %296 = vmatprep.subr.mxu0 0.0
    %297 = vmatpush1.msra.mxu0 %v107
    %298 = vmatprep.subr.mxu0 0.0
    %299 = vmatpush1.msra.mxu0 %v106
    %300 = vmatprep.subr.mxu0 0.0
    %301 = vmatpush1.msra.mxu0 %v105
    %302 = vmatprep.subr.mxu0 0.0
    %303 = vmatpush2.msra.mxu0 0.0
    %304 = vmatprep.subr.mxu0 0.0
    %305 = vmatpush2.msra.mxu0 0.0
    %306 = vmatprep.subr.mxu0 0.0
    %307 = vmatpush2.msra.mxu0 0.0
    %308 = vmatprep.subr.mxu0 0.0
    %309 = vmatpush2.msra.mxu0 0.0
    %310 = vmatprep.subr.mxu0 0.0
    %311 = vmatpush2.msra.mxu0 0.0
    %312 = vmatprep.subr.mxu0 0.0
    %313 = vmatpush2.msra.mxu0 0.0
    %314 = vmatprep.subr.mxu0 0.0
    %315 = vmatpush2.msra.mxu0 0.0
    %316 = vmatprep.subr.mxu0 0.0
    %317 = vmatpush2.msra.mxu0 0.0
    %318 = vmatprep.subr.mxu0 0.0
    %319 = vmatpush2.msra.mxu0 0.0
    %320 = vmatprep.subr.mxu0 0.0
    %321 = vmatpush2.msra.mxu0 0.0
    %322 = vmatprep.subr.mxu0 0.0
    %323 = vmatpush2.msra.mxu0 0.0
    %324 = vmatprep.subr.mxu0 0.0
    %325 = vmatpush2.msra.mxu0 0.0
    %326 = vmatprep.subr.mxu0 0.0
    %327 = vmatpush2.msra.mxu0 0.0
    %328 = vmatprep.subr.mxu0 0.0
    %329 = vmatpush2.msra.mxu0 0.0
    %330 = vmatprep.subr.mxu0 0.0
    %331 = vmatpush2.msra.mxu0 0.0
    %332 = vmatprep.subr.mxu0 0.0
    %333 = vmatpush2.msra.mxu0 0.0
    %334 = vmatprep.mubr.f32.mxu0 0.0
    %335 = vmatmul.mubr.f32.gmra.mxu0 %v269
    %v336 = vpop.f32.mrf.mxu0
    %v337 = vadd.f32 0.0, %v336
    %v338 = vpop.f32.mrf.mxu0
    %339 = vdwg.mxu0
    %v340 = vmul.f32 %v337, 0.125
    %v341 = vadd.f32 %v340, 1e-05
    %v342 = vrsqrt.pop %v341
    %v344 = vsel %vm194, %v342, 0
    %346 = vmatprep.subr.mxu0 0.0
    %347 = vmatpush1.msra.mxu0 0.0
    %348 = vmatprep.subr.mxu0 0.0
    %349 = vmatpush1.msra.mxu0 0.0
    %350 = vmatprep.subr.mxu0 0.0
    %351 = vmatpush1.msra.mxu0 0.0
    %352 = vmatprep.subr.mxu0 0.0
    %353 = vmatpush1.msra.mxu0 0.0
    %354 = vmatprep.subr.mxu0 0.0
    %355 = vmatpush1.msra.mxu0 0.0
    %356 = vmatprep.subr.mxu0 0.0
    %357 = vmatpush1.msra.mxu0 0.0
    %358 = vmatprep.subr.mxu0 0.0
    %359 = vmatpush1.msra.mxu0 0.0
    %360 = vmatprep.subr.mxu0 0.0
    %361 = vmatpush1.msra.mxu0 0.0
    %362 = vmatprep.subr.mxu0 0.0
    %363 = vmatpush1.msra.mxu0 0.0
    %364 = vmatprep.subr.mxu0 0.0
    %365 = vmatpush1.msra.mxu0 0.0
    %366 = vmatprep.subr.mxu0 0.0
    %367 = vmatpush1.msra.mxu0 0.0
    %368 = vmatprep.subr.mxu0 0.0
    %369 = vmatpush1.msra.mxu0 0.0
    %370 = vmatprep.subr.mxu0 0.0
    %371 = vmatpush1.msra.mxu0 0.0
    %372 = vmatprep.subr.mxu0 0.0
    %373 = vmatpush1.msra.mxu0 0.0
    %374 = vmatprep.subr.mxu0 0.0
    %375 = vmatpush1.msra.mxu0 %v122
    %376 = vmatprep.subr.mxu0 0.0
    %377 = vmatpush1.msra.mxu0 %v121
    %378 = vmatprep.subr.mxu0 0.0
    %379 = vmatpush2.msra.mxu0 0.0
    %380 = vmatprep.subr.mxu0 0.0
    %381 = vmatpush2.msra.mxu0 0.0
    %382 = vmatprep.subr.mxu0 0.0
    %383 = vmatpush2.msra.mxu0 0.0
    %384 = vmatprep.subr.mxu0 0.0
    %385 = vmatpush2.msra.mxu0 0.0
    %386 = vmatprep.subr.mxu0 0.0
    %387 = vmatpush2.msra.mxu0 0.0
    %388 = vmatprep.subr.mxu0 0.0
    %389 = vmatpush2.msra.mxu0 0.0
    %390 = vmatprep.subr.mxu0 0.0
    %391 = vmatpush2.msra.mxu0 0.0
    %392 = vmatprep.subr.mxu0 0.0
    %393 = vmatpush2.msra.mxu0 0.0
    %394 = vmatprep.subr.mxu0 0.0
    %395 = vmatpush2.msra.mxu0 0.0
    %396 = vmatprep.subr.mxu0 0.0
    %397 = vmatpush2.msra.mxu0 0.0
    %398 = vmatprep.subr.mxu0 0.0
    %399 = vmatpush2.msra.mxu0 0.0
    %400 = vmatprep.subr.mxu0 0.0
    %401 = vmatpush2.msra.mxu0 0.0
    %402 = vmatprep.subr.mxu0 0.0
    %403 = vmatpush2.msra.mxu0 0.0
    %404 = vmatprep.subr.mxu0 0.0
    %405 = vmatpush2.msra.mxu0 0.0
    %406 = vmatprep.subr.mxu0 0.0
    %407 = vmatpush2.msra.mxu0 0.0
    %408 = vmatprep.subr.mxu0 0.0
    %409 = vmatpush2.msra.mxu0 0.0
    %410 = vmatprep.mubr.f32.mxu0 0.0
    %411 = vmatmul.mubr.f32.gmra.mxu0 %v344
    %v412 = vpop.f32.mrf.mxu0
    %v413 = vadd.f32 0.0, %v412
    %v414 = vpop.f32.mrf.mxu0
    %415 = vdwg.mxu0
    %v416 = vmul.f32 %v268, %v413
    %v417 = vld [vmem:[%s2 + $0x1] sm:$0x1]
    %v418 = vlaneseq
    %v419 = vshrl.u32 %v418, 7
    %v420 = vsub.s32 0, %v419
    %v421 = vrot.slane %v417, %v420
    %v422 = vmul.f32 %v416, %v421
    %v423 = vld [vmem:[%s2 + $0x2] sm:$0x1]
    %v424 = vlaneseq
    %v425 = vshrl.u32 %v424, 7
    %v426 = vsub.s32 0, %v425
    %v427 = vrot.slane %v423, %v426
    %v428 = vadd.f32 %v422, %v427
    %v429 = vxor.u32 %v428, 2147483648
    %v430 = vmul.f32 %v429, 1.442695
    %v431 = vpow.pop %v430
    %v432 = vadd.f32 %v431, 1.0
    %v433 = vrcp.pop %v432
    %v434 = vmul.f32 1.0, %v433
    %v435 = vmul.f32 %v428, %v434
    %v436 = vld [vmem:[%s2 + $0x3] sm:$0x1]
    %v437 = vlaneseq
    %v438 = vshrl.u32 %v437, 7
    %v439 = vsub.s32 0, %v438
    %v440 = vrot.slane %v436, %v439
    %v441 = vmul.f32 %v435, %v440
    %v442 = vxor.u32 %v441, 2147483648
    %v443 = vmul.f32 %v442, 1.442695
    %v444 = vpow.pop %v443
    %v445 = vadd.f32 %v444, 1.0
    %v446 = vrcp.pop %v445
    %v447 = vmul.f32 1.0, %v446
    %v448 = vmul.f32 %v441, %v447
    %449 = vst [vmem:[#allocation2] sm:$0xff] %v448
    // Predicated region
    $region22: #{tpu_custom_call.1} parent=1 // pred_check
      _
    $region23: #{tpu_custom_call.1} parent=1 // pred_check_branch
      %451 = sbr.rel (0) target = $region25
    $region24: #{tpu_custom_call.1} parent=1 // pred_region
      %s453 = ssub.s32 128, 128
      %454 = vsyncadd [#allocation3], %s453
      %s456 = sshll.u32 [#allocation2], 4
      %s457 = int_to_ptr.vmem [resolvable:$true] %s456
      %459 = dma.vmem_to_hbm [thread:$0]  %s457, 128, %s5, [#allocation3]
    $region25: #{tpu_custom_call.1} parent=1 // pred_fallthru
      _
    // Predicated region
    $region26: #{tpu_custom_call.1} parent=1 // pred_check
      _
    $region27: #{tpu_custom_call.1} parent=1 // pred_check_branch
      %461 = sbr.rel (0) target = $region29
    $region28: #{tpu_custom_call.1} parent=1 // pred_region
      %462 = dma.done [#allocation3], 128
    $region29: #{tpu_custom_call.1} parent=1 // pred_fallthru
      _
    %463 = vsyncpa [#allocation3], 1

</llo_original>
